<compile_context>
chip_gen: v7x
topology: tpu7x:2x2x1
jax: 0.10.0
libtpu: 0.0.40
codegen_flags: <defaults>
</compile_context>

<pallas_src>
import math

import jax
import jax.numpy as jnp
from jax.experimental import pallas as pl
from jax.experimental.pallas import tpu as pltpu


# ----------------------------------------------------------------------------
# Kernel: one batch tile per grid step.
#   x_ref : (b_tile, C, L)    pe_ref : (C, L)    o_ref : (b_tile, C, L)
# ----------------------------------------------------------------------------
def _add_pe_kernel(x_ref, pe_ref, o_ref):
    # Add in the natively promoted dtype (no forced f32 round-trip); pe (C, L)
    # broadcasts over the leading batch dim for free on the VPU.
    o_ref[...] = (x_ref[...] + pe_ref[...]).astype(o_ref.dtype)
    # TODO(synk): training-mode dropout mask/scale would go here (eval = identity).


def make_positional_encoding(d_model, max_len=128, dtype=jnp.float32):
    """Builds the PyTorch `pe` buffer, returned as (d_model, max_len)."""
    assert d_model % 2 == 0, "PositionalEncoding requires even d_model (as in the torch code)"
    position = jnp.arange(max_len, dtype=jnp.float32)[:, None]            # (max_len, 1)
    div_term = jnp.exp(jnp.arange(0, d_model, 2, dtype=jnp.float32)
                       * (-math.log(10000.0) / d_model))                  # (d_model//2,)
    pe = jnp.zeros((max_len, d_model), jnp.float32)
    pe = pe.at[:, 0::2].set(jnp.sin(position * div_term))
    pe = pe.at[:, 1::2].set(jnp.cos(position * div_term))
    # torch: unsqueeze(0).transpose(1, 2) -> (1, d_model, max_len); we keep (d_model, max_len).
    return pe.T.astype(dtype)


# Per-grid-step working-set target: 2 pipeline buffers x (x tile + out tile)
# plus the resident pe table must stay under this.  28 MiB fits the 32 MiB
# default scoped VMEM on v6e/v7x and leaves headroom on v7x's 64 MiB physical.
_VMEM_BUDGET_BYTES = 28 * 1024 * 1024
# Explicit scoped-VMEM limit: above the 16 MiB v5e default, below v7x physical.
_VMEM_LIMIT_BYTES = 48 * 1024 * 1024


def positional_encoding_forward(x, pe, *, donate=True):
    """x: (B, C, L) with C <= d_model and L == max_len.  Returns x + pe[:C]."""
    B, C, L = x.shape
    d_model, max_len = pe.shape
    assert C <= d_model, "x channel dim exceeds d_model of the PE buffer"
    # Torch slices only the feature dim: pe[:, :x.size(1)]; the length dims
    # must already match under broadcasting, so we require L == max_len.
    assert L == max_len, "x length must equal the PE buffer max_len"
    # BlockSpec windowing constraint on the (C, L) pe block.
    assert C == d_model or C % 8 == 0, "C must be d_model or a multiple of 8"

    # Output dtype follows torch promotion (bf16 x + f32 pe -> f32 out).
    out_dtype = jnp.promote_types(x.dtype, pe.dtype)

    # Batch tile sized from the VMEM budget (double-buffered x and out tiles,
    # pe resident).  At small B this collapses to a single grid step.
    per_batch_bytes = C * L * (jnp.dtype(x.dtype).itemsize
                               + jnp.dtype(out_dtype).itemsize)
    pe_bytes = C * L * jnp.dtype(pe.dtype).itemsize
    avail = _VMEM_BUDGET_BYTES - 2 * pe_bytes
    b_tile = int(max(1, min(B, avail // (2 * per_batch_bytes))))
    num_blocks = pl.cdiv(B, b_tile)

    # Reuse x's buffer for the output when dtypes match (every element is
    # overwritten from its own block, so aliasing is safe).
    aliases = {0: 0} if (donate and out_dtype == jnp.dtype(x.dtype)) else {}

    return pl.pallas_call(
        _add_pe_kernel,
        out_shape=jax.ShapeDtypeStruct((B, C, L), out_dtype),
        grid=(num_blocks,),
        in_specs=[
            pl.BlockSpec((b_tile, C, L), lambda b: (b, 0, 0)),
            # Full pe buffer is passed; this BlockSpec windows rows 0:C and its
            # constant block index keeps it VMEM-resident across grid steps.
            pl.BlockSpec((C, L), lambda b: (0, 0)),
        ],
        out_specs=pl.BlockSpec((b_tile, C, L), lambda b: (b, 0, 0)),
        input_output_aliases=aliases,
        compiler_params=pltpu.CompilerParams(
            dimension_semantics=("parallel",),      # batch axis -> both TCs on v7x
            vmem_limit_bytes=_VMEM_LIMIT_BYTES,
        ),
    )(x, pe)


if __name__ == "__main__":
    # Shapes matching the module's use inside Deep_Conv_Transformer:
    # x is (batch, feature_channel_out, data_length); PE built with
    # d_model = feature_channel_out, max_len = data_length (default 128,
    # exactly one vreg lane width -> lane-dense, unmasked stores).
    B = 2
    d_model = 32
    max_len = 128
    drop_rate = 0.1  # eval mode: dropout is identity

    key = jax.random.PRNGKey(0)
    x = jax.random.normal(key, (B, d_model, max_len), jnp.float32)

    pe = make_positional_encoding(d_model, max_len)

    # Reference computed BEFORE the (output-aliasing) kernel call.
    ref = x + pe[None, :d_model, :]

    out = positional_encoding_forward(x, pe)
    jax.block_until_ready(out)

    assert out.shape == (B, d_model, max_len)
    assert out.dtype == ref.dtype
    assert jnp.allclose(out, ref, atol=1e-6), "mismatch vs. reference"

    print("KERNEL_OK")
</pallas_src>

<mosaic_0001>
module attributes {stable_mosaic.version = 11 : i64} {
  func.func @_add_pe_kernel(%arg0: i32, %arg1: memref<2x32x128xf32, #tpu.memory_space<vmem>>, %arg2: memref<32x128xf32, #tpu.memory_space<vmem>>, %arg3: memref<2x32x128xf32, #tpu.memory_space<vmem>>) attributes {dimension_semantics = [#tpu.dimension_semantics<parallel>], iteration_bounds = array<i64: 1>, scalar_prefetch = 0 : i64, scratch_operands = 0 : i64, tpu.core_type = #tpu.core_type<tc>, window_params = [{transform_indices = @transform_0, window_bounds = array<i64: 2, 32, 128>}, {pipeline_mode = #tpu.pipeline_mode<synchronous>, transform_indices = @transform_1, window_bounds = array<i64: 32, 128>}, {transform_indices = @transform_2, window_bounds = array<i64: 2, 32, 128>}]} {
    %c0 = arith.constant 0 : index
    %c0_0 = arith.constant 0 : index
    %c0_1 = arith.constant 0 : index
    %0 = vector.load %arg1[%c0, %c0_0, %c0_1] : memref<2x32x128xf32, #tpu.memory_space<vmem>>, vector<2x32x128xf32>
    %c0_2 = arith.constant 0 : index
    %c0_3 = arith.constant 0 : index
    %1 = vector.load %arg2[%c0_2, %c0_3] : memref<32x128xf32, #tpu.memory_space<vmem>>, vector<32x128xf32>
    %2 = vector.shape_cast %1 : vector<32x128xf32> to vector<1x32x128xf32>
    %3 = vector.broadcast %2 : vector<1x32x128xf32> to vector<2x32x128xf32>
    %4 = arith.addf %0, %3 : vector<2x32x128xf32>
    %c0_4 = arith.constant 0 : index
    %c0_5 = arith.constant 0 : index
    %c0_6 = arith.constant 0 : index
    %5 = vector.load %arg3[%c0_4, %c0_5, %c0_6] : memref<2x32x128xf32, #tpu.memory_space<vmem>>, vector<2x32x128xf32>
    tpu.vector_store %arg3[%c0_4, %c0_5, %c0_6], %4 {strides = array<i32>} : memref<2x32x128xf32, #tpu.memory_space<vmem>>, vector<2x32x128xf32>,
    return
  }
  func.func @transform_0(%arg0: i32) -> (i32, i32, i32) {
    %c0_i32 = arith.constant 0 : i32
    %c0_i32_0 = arith.constant 0 : i32
    %c0_i32_1 = arith.constant 0 : i32
    return %arg0, %c0_i32, %c0_i32_0 : i32, i32, i32
  }
  func.func @transform_1(%arg0: i32) -> (i32, i32) {
    %c0_i32 = arith.constant 0 : i32
    %c0_i32_0 = arith.constant 0 : i32
    %c0_i32_1 = arith.constant 0 : i32
    return %c0_i32, %c0_i32_0 : i32, i32
  }
  func.func @transform_2(%arg0: i32) -> (i32, i32, i32) {
    %c0_i32 = arith.constant 0 : i32
    %c0_i32_0 = arith.constant 0 : i32
    %c0_i32_1 = arith.constant 0 : i32
    return %arg0, %c0_i32, %c0_i32_0 : i32, i32, i32
  }
}

</mosaic_0001>

<llo_original>
// kernel: tpu_custom_call.1
$region0: #{tpu_custom_call.1}
  #allocation0 [shape = 'u32[]', space=smem, size = 0x4, offset = 0x4, fixed_abs, tag = 'smem constant byte address 0x4 - core index']
  #allocation1 [shape = 'u32[144,128]{1,0:T(1,128)}', space=vmem, size = 0x12000, scoped, tag = 'internal scratch']
  %s0 = inlined_call_operand.hbm [shape: f32[2,32,128], index: 0, kind: input, shape index: {}, may-alias: {0,2}]
  %s1 = inlined_call_operand.vmem [shape: f32[32,128], index: 1, kind: input, shape index: {}]
  %s2 = inlined_call_operand.hbm [shape: f32[2,32,128], index: 2, kind: output, shape index: {}, may-alias: {0,2}]
  %s3 = sld [smem:[#allocation0]]
  $region22: #{tpu_custom_call.1} parent=0
    _
  %s5 = ssub.s32 1, %s3
  %s6 = scalar_select 0, %s5, %s3
  $region1: #{tpu_custom_call.1} parent=0
    #allocation2 [shape = 'u8[32768]{0}', space=vmem, size = 0x8000, scoped, tag = 'input window, operand 0, single buffered']
    #allocation3 [shape = 's32[1]{0}', space=sflag, size = 0x4, scoped, tag = 'scoped memory for tpu_custom_call.1']
    #allocation4 [shape = 's32[1]{0}', space=sflag, size = 0x4, scoped, tag = 'scoped memory for tpu_custom_call.1']
    #allocation5 [shape = 'u8[32768]{0}', space=vmem, size = 0x8000, scoped, tag = 'output window, operand 0, single buffered']
    %7 = vsyncpa [#allocation3], 0
    %8 = vsyncpa [#allocation4], 0
    // Predicated region
    $region2: #{tpu_custom_call.1} parent=1 // pred_check
      _
    $region3: #{tpu_custom_call.1} parent=1 // pred_check_branch
      %10 = sbr.rel (0) target = $region5
    $region4: #{tpu_custom_call.1} parent=1 // pred_region
      %s12 = ssub.s32 1024, 1024
      %13 = vsyncadd [#allocation3], %s12
      %s14 = sshll.u32 [#allocation2], 4
      %s15 = int_to_ptr.vmem [resolvable:$true] %s14
      %20 = dma.hbm_to_vmem [thread:$0]  %s0, 1024, %s15, [#allocation3], 128, 128, 8
    $region5: #{tpu_custom_call.1} parent=1 // pred_fallthru
      _
    // Predicated region
    $region6: #{tpu_custom_call.1} parent=1 // pred_check
      _
    $region7: #{tpu_custom_call.1} parent=1 // pred_check_branch
      %22 = sbr.rel (0) target = $region9
    $region8: #{tpu_custom_call.1} parent=1 // pred_region
      _
    $region9: #{tpu_custom_call.1} parent=1 // pred_fallthru
      _
    // Predicated region
    $region10: #{tpu_custom_call.1} parent=1 // pred_check
      _
    $region11: #{tpu_custom_call.1} parent=1 // pred_check_branch
      %24 = sbr.rel (0) target = $region13
    $region12: #{tpu_custom_call.1} parent=1 // pred_region
      %25 = dma.done [#allocation3], 1024
    $region13: #{tpu_custom_call.1} parent=1 // pred_fallthru
      _
    %v26 = vld [vmem:[#allocation2] sm:$0xff]
    %v27 = vld [vmem:[#allocation2 + $0x8] sm:$0xff]
    %v28 = vld [vmem:[#allocation2 + $0x10] sm:$0xff]
    %v29 = vld [vmem:[#allocation2 + $0x18] sm:$0xff]
    %v30 = vld [vmem:[#allocation2 + $0x20] sm:$0xff]
    %v31 = vld [vmem:[#allocation2 + $0x28] sm:$0xff]
    %v32 = vld [vmem:[#allocation2 + $0x30] sm:$0xff]
    %v33 = vld [vmem:[#allocation2 + $0x38] sm:$0xff]
    %v34 = vld [vmem:[%s1] sm:$0xff]
    %v35 = vld [vmem:[%s1 + $0x8] sm:$0xff]
    %v36 = vld [vmem:[%s1 + $0x10] sm:$0xff]
    %v37 = vld [vmem:[%s1 + $0x18] sm:$0xff]
    %v38 = vadd.f32 %v26, %v34
    %v39 = vadd.f32 %v27, %v35
    %v40 = vadd.f32 %v28, %v36
    %v41 = vadd.f32 %v29, %v37
    %v42 = vadd.f32 %v30, %v34
    %v43 = vadd.f32 %v31, %v35
    %v44 = vadd.f32 %v32, %v36
    %v45 = vadd.f32 %v33, %v37
    %46 = vst [vmem:[#allocation5] sm:$0xff] %v38
    %47 = vst [vmem:[#allocation5 + $0x8] sm:$0xff] %v39
    %48 = vst [vmem:[#allocation5 + $0x10] sm:$0xff] %v40
    %49 = vst [vmem:[#allocation5 + $0x18] sm:$0xff] %v41
    %50 = vst [vmem:[#allocation5 + $0x20] sm:$0xff] %v42
    %51 = vst [vmem:[#allocation5 + $0x28] sm:$0xff] %v43
    %52 = vst [vmem:[#allocation5 + $0x30] sm:$0xff] %v44
    %53 = vst [vmem:[#allocation5 + $0x38] sm:$0xff] %v45
    // Predicated region
    $region14: #{tpu_custom_call.1} parent=1 // pred_check
      _
    $region15: #{tpu_custom_call.1} parent=1 // pred_check_branch
      %55 = sbr.rel (0) target = $region17
    $region16: #{tpu_custom_call.1} parent=1 // pred_region
      %s57 = ssub.s32 1024, 1024
      %58 = vsyncadd [#allocation4], %s57
      %s59 = sshll.u32 [#allocation5], 4
      %s60 = int_to_ptr.vmem [resolvable:$true] %s59
      %65 = dma.vmem_to_hbm [thread:$0]  %s60, 1024, %s2, [#allocation4], 128, 128, 8
    $region17: #{tpu_custom_call.1} parent=1 // pred_fallthru
      _
    // Predicated region
    $region18: #{tpu_custom_call.1} parent=1 // pred_check
      _
    $region19: #{tpu_custom_call.1} parent=1 // pred_check_branch
      %67 = sbr.rel (0) target = $region21
    $region20: #{tpu_custom_call.1} parent=1 // pred_region
      %68 = dma.done [#allocation4], 1024
    $region21: #{tpu_custom_call.1} parent=1 // pred_fallthru
      _
    %69 = vsyncpa [#allocation3], 1
    %70 = vsyncpa [#allocation4], 1

</llo_original>
